<compile_context>
chip_gen: v7x
topology: tpu7x:2x2x1
jax: 0.10.0
libtpu: 0.0.40
codegen_flags: <defaults>
</compile_context>

<pallas_src>
import math

import numpy as np
import jax
import jax.numpy as jnp
from jax.experimental import pallas as pl
from jax.experimental.pallas import tpu as pltpu


# --------------------------------------------------------------------------
# Parameter initialization (deterministic JAX port of init_nd_freqs)
# --------------------------------------------------------------------------
def init_nd_freqs(position_dim, head_dim, num_heads, theta=10.0, rotate=True,
                  key=None, dtype=jnp.float32):
    """Returns freqs of shape (num_heads, head_dim // 2, position_dim)."""
    assert head_dim % 4 == 0, "head_dim must be divisible by 4 for this init"
    thetas = jnp.full((position_dim,), theta, dtype=dtype)
    exps = jnp.arange(0, head_dim, 4, dtype=dtype)[None, :] / head_dim
    mag = 1.0 / thetas[:, None] ** exps                      # (P, head_dim//4)

    if key is None:
        key = jax.random.PRNGKey(0)

    per_dim = [[] for _ in range(position_dim)]
    for _ in range(num_heads):
        if rotate:
            key, sub = jax.random.split(key)
            angle = jax.random.uniform(sub, (1,), dtype=dtype) * 2.0 * math.pi
        else:
            angle = jnp.zeros((1,), dtype=dtype)
        for i in range(position_dim):
            f = jnp.concatenate(
                [mag[i] * jnp.cos(angle + math.pi * (2 * i) / (2 * position_dim)),
                 mag[i] * jnp.cos(angle + math.pi * (2 * i + 1) / (2 * position_dim))],
                axis=-1)                                      # (head_dim//2,)
            per_dim[i].append(f)
    freqs = [jnp.stack(d, axis=0) for d in per_dim]           # each (H, head_dim//2)
    return jnp.stack(freqs, axis=-1)                          # (H, head_dim//2, P)


# --------------------------------------------------------------------------
# Hardware-dependent tiling parameters
# --------------------------------------------------------------------------
def _hw_params():
    """(vmem_limit_bytes, tile_data_budget_bytes, multi_core)."""
    vmem_phys = 64 * 1024 * 1024                      # conservative: v7x per-TC
    try:
        vmem_phys = int(getattr(pltpu.get_tpu_info(),
                                "vmem_capacity_bytes", vmem_phys))
    except Exception:
        pass
    multi_core = True                                 # conservative default
    try:
        kind = jax.devices()[0].device_kind.lower()
        single_tc = ("v5 lite", "v5e", "v6 lite", "v6e")
        multi_core = not any(s in kind for s in single_tc)
    except Exception:
        pass
    # v7x (64 MiB):  limit 48 MiB, tile budget 36 MiB.
    # v5e/v6e (128 MiB): limit 96 MiB, tile budget 56 MiB.
    vmem_limit = min(vmem_phys * 3 // 4, 100 * 1024 * 1024)
    tile_budget = min(vmem_limit * 3 // 4, 56 * 1024 * 1024)
    return vmem_limit, tile_budget, multi_core


def _choose_tile_n(n_rows, lane_e, k_cols, itemsize, n_streams,
                   tile_budget, multi_core):
    """Row tile: large (HBM-roofline), VMEM-safe with double-buffering and
    in-kernel f32 temps accounted for, aligned to the native sublane tile."""
    lane_pad = -(-lane_e // 128) * 128
    k_pad = -(-k_cols // 128) * 128
    # double-buffered I/O blocks: pos (f32, lane-padded) + x in + x out
    io = 2 * n_streams * (4 * k_pad + 2 * itemsize * lane_pad)
    # in-kernel f32 temporaries (phase/cos, rolls, products) — generous
    scratch = 8 * 4 * lane_pad
    bytes_per_row = io + scratch

    row_align = 16 if itemsize < 4 else 8
    tn = 8192
    while tn > row_align and tn * bytes_per_row > tile_budget:
        tn //= 2
    cap = n_rows if n_rows <= row_align else (n_rows // row_align) * row_align
    tn = min(tn, cap)
    # Keep >= 4 steps only where megacore sharding exists (v7x); never shrink
    # below 512 rows (per-step overhead amortization on the HBM-bound kernel).
    min_steps = 4 if multi_core else 2
    while tn > 512 and -(-n_rows // tn) < min_steps:
        tn //= 2
    return max(1, tn)


# --------------------------------------------------------------------------
# Kernel: rotation on interleaved (re, im) channels, phase via MXU dot
# --------------------------------------------------------------------------
def _make_kernel(n_streams):
    def kernel(*refs):
        pos_refs = refs[:n_streams]
        x_refs = refs[n_streams:2 * n_streams]
        freqs_ref = refs[2 * n_streams]
        out_refs = refs[2 * n_streams + 1:]

        f = freqs_ref[...]                                    # (K, rE) f32
        tn, e = x_refs[0].shape
        # hoisted once, shared by query and key streams
        lane = jax.lax.broadcasted_iota(jnp.int32, (tn, e), 1)
        even = (lane % 2) == 0

        for pos_ref, x_ref, o_ref in zip(pos_refs, x_refs, out_refs):
            # phase = [pos | 1 | 0...] @ [freqs ; bias ; 0...]  (MXU, ~f32 acc)
            phase = jnp.dot(pos_ref[...].astype(jnp.float32), f,
                            precision=jax.lax.Precision.HIGHEST,
                            preferred_element_type=jnp.float32)
            # odd lanes carry a -pi/2 bias, so one cos() yields
            # cs[2j] = cos_j, cs[2j+1] = sin_j  (single EUP pass)
            cs = jnp.cos(phase)
            xf = x_ref[...].astype(jnp.float32)

            # out[2j]   = x[2j]*cos_j - x[2j+1]*sin_j
            # out[2j+1] = x[2j+1]*cos_j + x[2j]*sin_j
            cos_dup = jnp.where(even, cs, pltpu.roll(cs, 1, axis=1))
            term2 = jnp.where(even,
                              -pltpu.roll(xf * cs, e - 1, axis=1),
                              pltpu.roll(xf, 1, axis=1) * cs)
            o_ref[...] = (xf * cos_dup + term2).astype(o_ref.dtype)
    return kernel


def _rope_call(freqs_mat, xs, poss, vmem_limit, tile_budget, multi_core):
    """xs: list of (n, rE) arrays; poss: list of (n, K) f32 augmented positions."""
    n, e = xs[0].shape
    k = poss[0].shape[-1]
    n_streams = len(xs)
    itemsize = jnp.dtype(xs[0].dtype).itemsize

    tn = _choose_tile_n(n, e, k, itemsize, n_streams, tile_budget, multi_core)
    grid = (pl.cdiv(n, tn),)

    pos_spec = pl.BlockSpec((tn, k), lambda i: (i, 0))
    x_spec = pl.BlockSpec((tn, e), lambda i: (i, 0))
    f_spec = pl.BlockSpec(freqs_mat.shape, lambda i: (0, 0))
    out_shapes = tuple(jax.ShapeDtypeStruct((n, e), x.dtype) for x in xs)
    out_specs = tuple(pl.BlockSpec((tn, e), lambda i: (i, 0)) for _ in xs)
    if n_streams == 1:
        out_shapes, out_specs = out_shapes[0], out_specs[0]

    res = pl.pallas_call(
        _make_kernel(n_streams),
        out_shape=out_shapes,
        grid_spec=pltpu.PrefetchScalarGridSpec(
            num_scalar_prefetch=0,
            grid=grid,
            in_specs=[pos_spec] * n_streams + [x_spec] * n_streams + [f_spec],
            out_specs=out_specs,
        ),
        compiler_params=pltpu.CompilerParams(
            # TODO(synk): on v7x, confirm both TensorCores engage under
            # "parallel"; if a profile shows one TC idle, switch to
            # pltpu.CORE_PARALLEL or an explicit leading core axis.
            dimension_semantics=("parallel",),
            vmem_limit_bytes=vmem_limit),
    )(*poss, *xs, freqs_mat)
    return list(res) if n_streams > 1 else [res]


# --------------------------------------------------------------------------
# Module-level wrapper (mirrors RoPEEncodingND.forward)
# --------------------------------------------------------------------------
class RoPEEncodingND:
    def __init__(self, position_dim, embed_dim, n_heads, rope_base_theta=10.0,
                 key=None, dtype=jnp.float32):
        if embed_dim % n_heads != 0:
            raise ValueError("embed_dim must be divisible by n_heads")
        head_dim = embed_dim // n_heads
        if head_dim % 2 != 0:
            raise ValueError("head_dim must be divisible by 2")
        self.pos_dim = position_dim
        self.embed_dim = embed_dim
        self.n_heads = n_heads
        self.head_dim = head_dim

        freqs = init_nd_freqs(position_dim, head_dim, n_heads,
                              rope_base_theta, rotate=True, key=key, dtype=dtype)
        assert freqs.shape == (n_heads, head_dim // 2, position_dim)
        self.freqs = freqs                                    # (H, D/2, P)

        self._vmem_limit, self._tile_budget, self._multi_core = _hw_params()

        # fold factor making the kernel's lane width a multiple of 128
        self.fold_r = 128 // math.gcd(embed_dim, 128)

        # (P, E): frequency of pair j duplicated at interleaved lanes 2j, 2j+1
        freqs_pair = np.asarray(freqs, np.float32).reshape(embed_dim // 2,
                                                           position_dim)
        self._freqs_int = np.repeat(freqs_pair.T, 2, axis=1)  # (P, E) numpy

        self._freqs_mat_plain = jnp.asarray(self._build_freqs_mat(1))
        self._freqs_mat_fold = (jnp.asarray(self._build_freqs_mat(self.fold_r))
                                if self.fold_r > 1 else self._freqs_mat_plain)

    def _build_freqs_mat(self, r):
        """Block-diagonal (K, r*E) phase matrix; row r*P is the [-pi/2] odd-lane
        bias (driven by a ones column in pos); K padded to a multiple of 8."""
        E, P = self.embed_dim, self.pos_dim
        k = -(-(r * P + 1) // 8) * 8
        mat = np.zeros((k, r * E), np.float32)
        for s in range(r):
            mat[s * P:(s + 1) * P, s * E:(s + 1) * E] = self._freqs_int
        mat[r * P, :] = np.tile(np.array([0.0, -0.5 * math.pi], np.float32),
                                r * E // 2)
        return mat

    def _shape_check(self, x, x_pos):
        if x.ndim != x_pos.ndim:
            raise ValueError("query/key and positions must have same ndim")
        if x.shape[-1] != self.embed_dim:
            raise ValueError("last dim of query/key must equal embed_dim")
        if x_pos.shape[-1] != self.pos_dim:
            raise ValueError("last dim of positions must equal pos_dim")
        if x.shape[:-1] != x_pos.shape[:-1]:
            raise ValueError("leading dims of query/key and positions must match")

    def _apply_streams(self, x_list, pos_list):
        """Rotate one or two same-shape tensors in a single pallas_call."""
        leading = x_list[0].shape[:-1]
        E, P = self.embed_dim, self.pos_dim
        n = int(np.prod(leading)) if leading else 1

        # lane-dense fold when the row count allows it
        r = self.fold_r if (self.fold_r > 1 and n % self.fold_r == 0) else 1
        fmat = self._freqs_mat_fold if r > 1 else self._freqs_mat_plain
        k_cols = fmat.shape[0]

        xs, poss = [], []
        for x, p in zip(x_list, pos_list):
            xs.append(x.reshape(n // r, r * E))               # free reshape
            p2 = p.astype(jnp.float32).reshape(n // r, r * P)
            cols = [p2, jnp.ones((n // r, 1), jnp.float32)]
            pad = k_cols - (r * P + 1)
            if pad:
                cols.append(jnp.zeros((n // r, pad), jnp.float32))
            poss.append(jnp.concatenate(cols, axis=-1))       # tiny copy (pos only)

        outs = _rope_call(fmat, xs, poss, self._vmem_limit,
                          self._tile_budget, self._multi_core)
        return [o.reshape(x.shape) for o, x in zip(outs, x_list)]

    def __call__(self, query, query_pos, key=None, key_pos=None):
        # TODO(synk): PyTorch version warns when coordinates look normalized
        # (max <= 1); skipped to avoid a host sync inside the forward pass.
        self._shape_check(query, query_pos)
        if key is None:
            return self._apply_streams([query], [query_pos])[0]

        kp = key_pos if key_pos is not None else query_pos
        self._shape_check(key, kp)
        if key.shape == query.shape and kp.shape == query_pos.shape:
            q_rot, k_rot = self._apply_streams([query, key], [query_pos, kp])
            return q_rot, k_rot
        # fallback (e.g. cross-attention with a different key length)
        return (self._apply_streams([query], [query_pos])[0],
                self._apply_streams([key], [kp])[0])


# --------------------------------------------------------------------------
# Pure-JAX reference for validation (exact f32 phase)
# --------------------------------------------------------------------------
def _rope_reference(x, pos, freqs):
    E = x.shape[-1]
    P = pos.shape[-1]
    fr = freqs.reshape(-1, P).astype(jnp.float32)             # (E/2, P)
    posf = pos.astype(jnp.float32)
    phase = jnp.zeros(x.shape[:-1] + (E // 2,), jnp.float32)
    for p in range(P):
        phase = phase + posf[..., p:p + 1] * fr[:, p]
    xc = x.reshape(x.shape[:-1] + (E // 2, 2)).astype(jnp.float32)
    xr, xi = xc[..., 0], xc[..., 1]
    c, s = jnp.cos(phase), jnp.sin(phase)
    out = jnp.stack([xr * c - xi * s, xr * s + xi * c], axis=-1)
    return out.reshape(x.shape).astype(x.dtype)


if __name__ == "__main__":
    rng = jax.random.PRNGKey(0)
    ks = jax.random.split(rng, 8)
    # kernel phase uses the MXU (multi-pass bf16 at HIGHEST ~ f32); allow a
    # slightly looser atol than exact-f32 for that path
    TOL = dict(rtol=1e-4, atol=2e-4)

    # Case 1: embed_dim=32 (< 128) -> lane-dense row folding (r=4), MXU phase.
    pos_dim, embed_dim, n_heads = 2, 32, 4
    batch, seq = 2, 64
    rope = RoPEEncodingND(pos_dim, embed_dim, n_heads, rope_base_theta=10.0,
                          key=ks[0])
    q = jax.random.normal(ks[1], (batch, seq, embed_dim), jnp.float32)
    k = jax.random.normal(ks[2], (batch, seq, embed_dim), jnp.float32)
    qp = jax.random.uniform(ks[3], (batch, seq, pos_dim), jnp.float32) * 16.0
    kp = jax.random.uniform(ks[4], (batch, seq, pos_dim), jnp.float32) * 16.0

    q_rot = jax.block_until_ready(rope(q, qp))
    np.testing.assert_allclose(np.asarray(q_rot),
                               np.asarray(_rope_reference(q, qp, rope.freqs)), **TOL)

    q_rot2, k_rot = rope(q, qp, k, kp)
    jax.block_until_ready((q_rot2, k_rot))
    np.testing.assert_allclose(np.asarray(q_rot2),
                               np.asarray(_rope_reference(q, qp, rope.freqs)), **TOL)
    np.testing.assert_allclose(np.asarray(k_rot),
                               np.asarray(_rope_reference(k, kp, rope.freqs)), **TOL)

    # Case 2: embed_dim=128 (already lane-dense, r=1), pos_dim=3, plus a key
    # with a different sequence length (non-fused fallback path).
    pos_dim2, embed_dim2, n_heads2 = 3, 128, 2
    rope2 = RoPEEncodingND(pos_dim2, embed_dim2, n_heads2, rope_base_theta=100.0,
                           key=ks[5])
    q2 = jax.random.normal(ks[6], (2, 40, embed_dim2), jnp.float32)
    k2 = jax.random.normal(ks[7], (2, 24, embed_dim2), jnp.float32)
    qp2 = jax.random.uniform(ks[3], (2, 40, pos_dim2), jnp.float32) * 32.0
    kp2 = jax.random.uniform(ks[4], (2, 24, pos_dim2), jnp.float32) * 32.0
    q2_rot, k2_rot = rope2(q2, qp2, k2, kp2)
    jax.block_until_ready((q2_rot, k2_rot))
    np.testing.assert_allclose(np.asarray(q2_rot),
                               np.asarray(_rope_reference(q2, qp2, rope2.freqs)), **TOL)
    np.testing.assert_allclose(np.asarray(k2_rot),
                               np.asarray(_rope_reference(k2, kp2, rope2.freqs)), **TOL)

    # Case 3: row count not divisible by the fold factor -> unfolded fallback,
    # with bf16 inputs passed through (kernel math stays f32, output bf16).
    q3 = jax.random.normal(ks[1], (3, 21, embed_dim),
                           jnp.float32).astype(jnp.bfloat16)
    qp3 = jax.random.uniform(ks[3], (3, 21, pos_dim), jnp.float32) * 16.0
    q3_rot = jax.block_until_ready(rope(q3, qp3))
    assert q3_rot.dtype == jnp.bfloat16
    np.testing.assert_allclose(
        np.asarray(jnp.asarray(q3_rot, jnp.float32)),
        np.asarray(_rope_reference(q3.astype(jnp.float32), qp3, rope.freqs)),
        rtol=2e-2, atol=2e-2)

    print("KERNEL_OK")
</pallas_src>

<mosaic_0001>
module attributes {stable_mosaic.version = 11 : i64} {
  func.func @kernel(%arg0: i32, %arg1: memref<32x16xf32, #tpu.memory_space<vmem>>, %arg2: memref<32x128xf32, #tpu.memory_space<vmem>>, %arg3: memref<16x128xf32, #tpu.memory_space<vmem>>, %arg4: memref<32x128xf32, #tpu.memory_space<vmem>>) attributes {dimension_semantics = [#tpu.dimension_semantics<parallel>], iteration_bounds = array<i64: 1>, scalar_prefetch = 0 : i64, scratch_operands = 0 : i64, tpu.core_type = #tpu.core_type<tc>, window_params = [{transform_indices = @transform_0, window_bounds = array<i64: 32, 16>}, {transform_indices = @transform_1, window_bounds = array<i64: 32, 128>}, {pipeline_mode = #tpu.pipeline_mode<synchronous>, transform_indices = @transform_2, window_bounds = array<i64: 16, 128>}, {transform_indices = @transform_3, window_bounds = array<i64: 32, 128>}]} {
    %c0 = arith.constant 0 : index
    %c0_0 = arith.constant 0 : index
    %0 = vector.load %arg3[%c0, %c0_0] : memref<16x128xf32, #tpu.memory_space<vmem>>, vector<16x128xf32>
    %1 = tpu.iota {dimensions = array<i32: 1>} : vector<32x128xi32>
    %c2_i32 = arith.constant 2 : i32
    %c0_i32 = arith.constant 0 : i32
    %2 = arith.cmpi eq, %c2_i32, %c0_i32 : i32
    %c1_i32 = arith.constant 1 : i32
    %3 = arith.select %2, %c1_i32, %c2_i32 : i32
    %4 = vector.broadcast %3 : i32 to vector<32x128xi32>
    %5 = arith.remsi %1, %4 : vector<32x128xi32>
    %c0_i32_1 = arith.constant 0 : i32
    %6 = vector.broadcast %c0_i32_1 : i32 to vector<32x128xi32>
    %7 = arith.cmpi ne, %5, %6 : vector<32x128xi32>
    %c0_i32_2 = arith.constant 0 : i32
    %8 = vector.broadcast %c0_i32_2 : i32 to vector<32x128xi32>
    %9 = arith.cmpi slt, %5, %8 : vector<32x128xi32>
    %c0_i32_3 = arith.constant 0 : i32
    %10 = arith.cmpi slt, %3, %c0_i32_3 : i32
    %11 = vector.broadcast %10 : i1 to vector<32x128xi1>
    %12 = vector.broadcast %11 : vector<32x128xi1> to vector<32x128xi1>
    %13 = arith.xori %9, %12 : vector<32x128xi1>
    %14 = arith.andi %13, %7 : vector<32x128xi1>
    %15 = vector.broadcast %3 : i32 to vector<32x128xi32>
    %16 = arith.addi %5, %15 : vector<32x128xi32>
    %17 = arith.select %14, %16, %5 : vector<32x128xi1>, vector<32x128xi32>
    %c0_i32_4 = arith.constant 0 : i32
    %18 = vector.broadcast %c0_i32_4 : i32 to vector<32x128xi32>
    %19 = arith.cmpi eq, %17, %18 : vector<32x128xi32>
    %c0_5 = arith.constant 0 : index
    %c0_6 = arith.constant 0 : index
    %20 = vector.load %arg1[%c0_5, %c0_6] : memref<32x16xf32, #tpu.memory_space<vmem>>, vector<32x16xf32>
    %cst = arith.constant dense<0.000000e+00> : vector<32x128xf32>
    %21 = tpu.matmul %20, %0, %cst {dimension_numbers = #tpu.dot_dimension_numbers<[1], [0], [0], [1], [0, 0, 1, 1], [], []>, precision = #tpu.contract_precision<fp32>} : vector<32x16xf32>, vector<16x128xf32>, vector<32x128xf32> -> vector<32x128xf32>
    %22 = math.cos %21 : vector<32x128xf32>
    %c0_7 = arith.constant 0 : index
    %c0_8 = arith.constant 0 : index
    %23 = vector.load %arg2[%c0_7, %c0_8] : memref<32x128xf32, #tpu.memory_space<vmem>>, vector<32x128xf32>
    %c1_i32_9 = arith.constant 1 : i32
    %24 = tpu.dynamic_rotate %22 by %c1_i32_9 dim 1 : vector<32x128xf32>, i32 -> vector<32x128xf32>
    %25 = arith.select %19, %22, %24 : vector<32x128xi1>, vector<32x128xf32>
    %26 = arith.mulf %23, %22 : vector<32x128xf32>
    %c127_i32 = arith.constant 127 : i32
    %27 = tpu.dynamic_rotate %26 by %c127_i32 dim 1 : vector<32x128xf32>, i32 -> vector<32x128xf32>
    %cst_10 = arith.constant 0.000000e+00 : f32
    %28 = vector.broadcast %cst_10 : f32 to vector<32x128xf32>
    %29 = arith.subf %28, %27 : vector<32x128xf32>
    %c1_i32_11 = arith.constant 1 : i32
    %30 = tpu.dynamic_rotate %23 by %c1_i32_11 dim 1 : vector<32x128xf32>, i32 -> vector<32x128xf32>
    %31 = arith.mulf %30, %22 : vector<32x128xf32>
    %32 = arith.select %19, %29, %31 : vector<32x128xi1>, vector<32x128xf32>
    %33 = arith.mulf %23, %25 : vector<32x128xf32>
    %34 = arith.addf %33, %32 : vector<32x128xf32>
    %c0_12 = arith.constant 0 : index
    %c0_13 = arith.constant 0 : index
    %35 = vector.load %arg4[%c0_12, %c0_13] : memref<32x128xf32, #tpu.memory_space<vmem>>, vector<32x128xf32>
    tpu.vector_store %arg4[%c0_12, %c0_13], %34 {strides = array<i32>} : memref<32x128xf32, #tpu.memory_space<vmem>>, vector<32x128xf32>,
    return
  }
  func.func @transform_0(%arg0: i32) -> (i32, i32) {
    %c0_i32 = arith.constant 0 : i32
    %c0_i32_0 = arith.constant 0 : i32
    return %arg0, %c0_i32 : i32, i32
  }
  func.func @transform_1(%arg0: i32) -> (i32, i32) {
    %c0_i32 = arith.constant 0 : i32
    %c0_i32_0 = arith.constant 0 : i32
    return %arg0, %c0_i32 : i32, i32
  }
  func.func @transform_2(%arg0: i32) -> (i32, i32) {
    %c0_i32 = arith.constant 0 : i32
    %c0_i32_0 = arith.constant 0 : i32
    %c0_i32_1 = arith.constant 0 : i32
    return %c0_i32, %c0_i32_0 : i32, i32
  }
  func.func @transform_3(%arg0: i32) -> (i32, i32) {
    %c0_i32 = arith.constant 0 : i32
    %c0_i32_0 = arith.constant 0 : i32
    return %arg0, %c0_i32 : i32, i32
  }
}

</mosaic_0001>

<llo_original>
// kernel: tpu_custom_call.1
$region0: #{tpu_custom_call.1}
  #allocation0 [shape = 'u32[]', space=smem, size = 0x4, offset = 0x4, fixed_abs, tag = 'smem constant byte address 0x4 - core index']
  #allocation1 [shape = 'u32[144,128]{1,0:T(1,128)}', space=vmem, size = 0x12000, scoped, tag = 'internal scratch']
  %s0 = inlined_call_operand.vmem [shape: f32[32,16], index: 0, kind: input, shape index: {}]
  %s1 = inlined_call_operand.vmem [shape: f32[32,128], index: 1, kind: input, shape index: {}]
  %s2 = inlined_call_operand.vmem [shape: f32[16,128], index: 2, kind: input, shape index: {}]
  %s3 = inlined_call_operand.hbm [shape: f32[32,128], index: 3, kind: output, shape index: {}]
  %s4 = sld [smem:[#allocation0]]
  $region22: #{tpu_custom_call.1} parent=0
    _
  %s6 = ssub.s32 1, %s4
  %s7 = scalar_select 0, %s6, %s4
  $region1: #{tpu_custom_call.1} parent=0
    #allocation2 [shape = 'u8[16384]{0}', space=vmem, size = 0x4000, scoped, tag = 'output window, operand 0, single buffered']
    #allocation3 [shape = 's32[1]{0}', space=sflag, size = 0x4, scoped, tag = 'scoped memory for tpu_custom_call.1']
    %8 = vsyncpa [#allocation3], 0
    // Predicated region
    $region2: #{tpu_custom_call.1} parent=1 // pred_check
      _
    $region3: #{tpu_custom_call.1} parent=1 // pred_check_branch
      %10 = sbr.rel (0) target = $region5
    $region4: #{tpu_custom_call.1} parent=1 // pred_region
      _
    $region5: #{tpu_custom_call.1} parent=1 // pred_fallthru
      _
    // Predicated region
    $region6: #{tpu_custom_call.1} parent=1 // pred_check
      _
    $region7: #{tpu_custom_call.1} parent=1 // pred_check_branch
      %12 = sbr.rel (0) target = $region9
    $region8: #{tpu_custom_call.1} parent=1 // pred_region
      _
    $region9: #{tpu_custom_call.1} parent=1 // pred_fallthru
      _
    // Predicated region
    $region10: #{tpu_custom_call.1} parent=1 // pred_check
      _
    $region11: #{tpu_custom_call.1} parent=1 // pred_check_branch
      %14 = sbr.rel (0) target = $region13
    $region12: #{tpu_custom_call.1} parent=1 // pred_region
      _
    $region13: #{tpu_custom_call.1} parent=1 // pred_fallthru
      _
    %v15 = vld [vmem:[%s2] sm:$0xff]
    %v16 = vld [vmem:[%s2 + $0x8] sm:$0xff]
    %v17 = vlaneseq
    %v18 = vand.u32 %v17, 127
    %vm19 = vcmp.lt.s32.totalorder %v18, 0
    %v20 = vsub.s32 0, %v18
    %v21 = vsel %vm19, %v20, %v18
    %v22 = vshrl.u32 %v21, 1
    %v23 = vand.u32 %v21, 1
    %v24 = vsub.s32 0, %v23
    %v25 = vsel %vm19, %v24, %v23
    %vm26 = vcmp.ne.s32.totalorder %v25, 0
    %vm27 = vcmp.lt.s32.totalorder %v25, 0
    %vm28 = vmand %vm27, %vm26
    %v29 = vadd.s32 %v25, 2
    %v30 = vsel %vm28, %v29, %v25
    %vm31 = vcmp.eq.s32.totalorder %v30, 0
    %v32 = vld [vmem:[%s0] sm:$0xff]
    %v33 = vld [vmem:[%s0 + $0x8] sm:$0xff]
    %v34 = vld [vmem:[%s0 + $0x10] sm:$0xff]
    %v35 = vld [vmem:[%s0 + $0x18] sm:$0xff]
    %vm36 = vcmask 130048
    %v38 = vsel %vm36, %v32, 0
    %v41 = vsel %vm36, %v33, 0
    %v44 = vsel %vm36, %v34, 0
    %v47 = vsel %vm36, %v35, 0
    %49 = vmatprep.subr.mxu0 0.0
    %v50 = vand.u32 %v15, 4294901760
    %51 = vmatpush1.msra.mxu0 %v50
    %52 = vmatprep.subr.mxu0 0.0
    %v53 = vand.u32 %v16, 4294901760
    %54 = vmatpush1.msra.mxu0 %v53
    %55 = vmatprep.subr.mxu0 0.0
    %56 = vmatpush1.msra.mxu0 0.0
    %57 = vmatprep.subr.mxu0 0.0
    %58 = vmatpush1.msra.mxu0 0.0
    %59 = vmatprep.subr.mxu0 0.0
    %60 = vmatpush1.msra.mxu0 0.0
    %61 = vmatprep.subr.mxu0 0.0
    %62 = vmatpush1.msra.mxu0 0.0
    %63 = vmatprep.subr.mxu0 0.0
    %64 = vmatpush1.msra.mxu0 0.0
    %65 = vmatprep.subr.mxu0 0.0
    %66 = vmatpush1.msra.mxu0 0.0
    %67 = vmatprep.subr.mxu0 0.0
    %68 = vmatpush1.msra.mxu0 0.0
    %69 = vmatprep.subr.mxu0 0.0
    %70 = vmatpush1.msra.mxu0 0.0
    %71 = vmatprep.subr.mxu0 0.0
    %72 = vmatpush1.msra.mxu0 0.0
    %73 = vmatprep.subr.mxu0 0.0
    %74 = vmatpush1.msra.mxu0 0.0
    %75 = vmatprep.subr.mxu0 0.0
    %76 = vmatpush1.msra.mxu0 0.0
    %77 = vmatprep.subr.mxu0 0.0
    %78 = vmatpush1.msra.mxu0 0.0
    %79 = vmatprep.subr.mxu0 0.0
    %80 = vmatpush1.msra.mxu0 0.0
    %81 = vmatprep.subr.mxu0 0.0
    %82 = vmatpush1.msra.mxu0 0.0
    %83 = vmatprep.subr.mxu0 0.0
    %84 = vmatpush1.msra.mxu0 0.0
    %85 = vmatprep.subr.mxu0 0.0
    %86 = vmatpush1.msra.mxu0 0.0
    %87 = vmatprep.subr.mxu0 0.0
    %88 = vmatpush1.msra.mxu0 0.0
    %89 = vmatprep.subr.mxu0 0.0
    %90 = vmatpush1.msra.mxu0 0.0
    %91 = vmatprep.subr.mxu0 0.0
    %92 = vmatpush1.msra.mxu0 0.0
    %93 = vmatprep.subr.mxu0 0.0
    %94 = vmatpush1.msra.mxu0 0.0
    %95 = vmatprep.subr.mxu0 0.0
    %96 = vmatpush1.msra.mxu0 0.0
    %97 = vmatprep.subr.mxu0 0.0
    %98 = vmatpush1.msra.mxu0 0.0
    %99 = vmatprep.subr.mxu0 0.0
    %100 = vmatpush1.msra.mxu0 0.0
    %101 = vmatprep.subr.mxu0 0.0
    %102 = vmatpush1.msra.mxu0 0.0
    %103 = vmatprep.subr.mxu0 0.0
    %104 = vmatpush1.msra.mxu0 0.0
    %105 = vmatprep.subr.mxu0 0.0
    %106 = vmatpush1.msra.mxu0 0.0
    %107 = vmatprep.subr.mxu0 0.0
    %108 = vmatpush1.msra.mxu0 0.0
    %109 = vmatprep.subr.mxu0 0.0
    %110 = vmatpush1.msra.mxu0 0.0
    %111 = vmatprep.subr.mxu0 0.0
    %112 = vmatpush1.msra.mxu0 0.0
    %113 = vmatprep.subr.mxu0 0.0
    %114 = vmatpush1.msra.mxu0 0.0
    %115 = vmatprep.mubr.f32.mxu0 0.0
    %v116 = vand.u32 %v38, 4294901760
    %v117 = vsub.f32 %v38, %v116
    %v118 = vand.u32 %v117, 4294901760
    %v119 = vsub.f32 %v117, %v118
    %v120 = vand.u32 %v119, 4294901760
    %121 = vmatmul.mubr.f32.gmra.mrb[0].mxu0 %v120
    %v122 = vpop.f32.mrb[0].mxu0
    %v123 = vadd.f32 0.0, %v122
    %v124 = vpop.f32.mrb[0].mxu0
    %125 = vmatprep.mubr.f32.mxu0 0.0
    %v126 = vand.u32 %v41, 4294901760
    %v127 = vsub.f32 %v41, %v126
    %v128 = vand.u32 %v127, 4294901760
    %v129 = vsub.f32 %v127, %v128
    %v130 = vand.u32 %v129, 4294901760
    %131 = vmatmul.mubr.f32.gmra.mrb[0].mxu0 %v130
    %v132 = vpop.f32.mrb[0].mxu0
    %v133 = vadd.f32 0.0, %v132
    %v134 = vpop.f32.mrb[0].mxu0
    %135 = vmatprep.mubr.f32.mxu0 0.0
    %v136 = vand.u32 %v44, 4294901760
    %v137 = vsub.f32 %v44, %v136
    %v138 = vand.u32 %v137, 4294901760
    %v139 = vsub.f32 %v137, %v138
    %v140 = vand.u32 %v139, 4294901760
    %141 = vmatmul.mubr.f32.gmra.mrb[0].mxu0 %v140
    %v142 = vpop.f32.mrb[0].mxu0
    %v143 = vadd.f32 0.0, %v142
    %v144 = vpop.f32.mrb[0].mxu0
    %145 = vmatprep.mubr.f32.mxu0 0.0
    %v146 = vand.u32 %v47, 4294901760
    %v147 = vsub.f32 %v47, %v146
    %v148 = vand.u32 %v147, 4294901760
    %v149 = vsub.f32 %v147, %v148
    %v150 = vand.u32 %v149, 4294901760
    %151 = vmatmul.mubr.f32.gmra.mrb[0].mxu0 %v150
    %v152 = vpop.f32.mrb[0].mxu0
    %v153 = vadd.f32 0.0, %v152
    %v154 = vpop.f32.mrb[0].mxu0
    %155 = vdwg.mxu0
    %156 = vmatprep.subr.mxu0 0.0
    %v157 = vand.u32 %v15, 4294901760
    %v158 = vsub.f32 %v15, %v157
    %v159 = vand.u32 %v158, 4294901760
    %v160 = vsub.f32 %v158, %v159
    %v161 = vand.u32 %v160, 4294901760
    %162 = vmatpush1.msra.mxu0 %v161
    %163 = vmatprep.subr.mxu0 0.0
    %v164 = vand.u32 %v16, 4294901760
    %v165 = vsub.f32 %v16, %v164
    %v166 = vand.u32 %v165, 4294901760
    %v167 = vsub.f32 %v165, %v166
    %v168 = vand.u32 %v167, 4294901760
    %169 = vmatpush1.msra.mxu0 %v168
    %170 = vmatprep.subr.mxu0 0.0
    %171 = vmatpush1.msra.mxu0 0.0
    %172 = vmatprep.subr.mxu0 0.0
    %173 = vmatpush1.msra.mxu0 0.0
    %174 = vmatprep.subr.mxu0 0.0
    %175 = vmatpush1.msra.mxu0 0.0
    %176 = vmatprep.subr.mxu0 0.0
    %177 = vmatpush1.msra.mxu0 0.0
    %178 = vmatprep.subr.mxu0 0.0
    %179 = vmatpush1.msra.mxu0 0.0
    %180 = vmatprep.subr.mxu0 0.0
    %181 = vmatpush1.msra.mxu0 0.0
    %182 = vmatprep.subr.mxu0 0.0
    %183 = vmatpush1.msra.mxu0 0.0
    %184 = vmatprep.subr.mxu0 0.0
    %185 = vmatpush1.msra.mxu0 0.0
    %186 = vmatprep.subr.mxu0 0.0
    %187 = vmatpush1.msra.mxu0 0.0
    %188 = vmatprep.subr.mxu0 0.0
    %189 = vmatpush1.msra.mxu0 0.0
    %190 = vmatprep.subr.mxu0 0.0
    %191 = vmatpush1.msra.mxu0 0.0
    %192 = vmatprep.subr.mxu0 0.0
    %193 = vmatpush1.msra.mxu0 0.0
    %194 = vmatprep.subr.mxu0 0.0
    %195 = vmatpush1.msra.mxu0 0.0
    %196 = vmatprep.subr.mxu0 0.0
    %197 = vmatpush1.msra.mxu0 0.0
    %198 = vmatprep.subr.mxu0 0.0
    %199 = vmatpush1.msra.mxu0 0.0
    %200 = vmatprep.subr.mxu0 0.0
    %201 = vmatpush1.msra.mxu0 0.0
    %202 = vmatprep.subr.mxu0 0.0
    %203 = vmatpush1.msra.mxu0 0.0
    %204 = vmatprep.subr.mxu0 0.0
    %205 = vmatpush1.msra.mxu0 0.0
    %206 = vmatprep.subr.mxu0 0.0
    %207 = vmatpush1.msra.mxu0 0.0
    %208 = vmatprep.subr.mxu0 0.0
    %209 = vmatpush1.msra.mxu0 0.0
    %210 = vmatprep.subr.mxu0 0.0
    %211 = vmatpush1.msra.mxu0 0.0
    %212 = vmatprep.subr.mxu0 0.0
    %213 = vmatpush1.msra.mxu0 0.0
    %214 = vmatprep.subr.mxu0 0.0
    %215 = vmatpush1.msra.mxu0 0.0
    %216 = vmatprep.subr.mxu0 0.0
    %217 = vmatpush1.msra.mxu0 0.0
    %218 = vmatprep.subr.mxu0 0.0
    %219 = vmatpush1.msra.mxu0 0.0
    %220 = vmatprep.subr.mxu0 0.0
    %221 = vmatpush1.msra.mxu0 0.0
    %222 = vmatprep.subr.mxu0 0.0
    %223 = vmatpush1.msra.mxu0 0.0
    %224 = vmatprep.subr.mxu0 0.0
    %225 = vmatpush1.msra.mxu0 0.0
    %226 = vmatprep.subr.mxu0 0.0
    %227 = vmatpush1.msra.mxu0 0.0
    %228 = vmatprep.subr.mxu0 0.0
    %229 = vmatpush1.msra.mxu0 0.0
    %230 = vmatprep.mubr.f32.mxu0 0.0
    %v231 = vand.u32 %v38, 4294901760
    %232 = vmatmul.mubr.f32.gmra.mrb[0].mxu0 %v231
    %v233 = vpop.f32.mrb[0].mxu0
    %v234 = vadd.f32 %v123, %v233
    %v235 = vpop.f32.mrb[0].mxu0
    %236 = vmatprep.mubr.f32.mxu0 0.0
    %v237 = vand.u32 %v41, 4294901760
    %238 = vmatmul.mubr.f32.gmra.mrb[0].mxu0 %v237
    %v239 = vpop.f32.mrb[0].mxu0
    %v240 = vadd.f32 %v133, %v239
    %v241 = vpop.f32.mrb[0].mxu0
    %242 = vmatprep.mubr.f32.mxu0 0.0
    %v243 = vand.u32 %v44, 4294901760
    %244 = vmatmul.mubr.f32.gmra.mrb[0].mxu0 %v243
    %v245 = vpop.f32.mrb[0].mxu0
    %v246 = vadd.f32 %v143, %v245
    %v247 = vpop.f32.mrb[0].mxu0
    %248 = vmatprep.mubr.f32.mxu0 0.0
    %v249 = vand.u32 %v47, 4294901760
    %250 = vmatmul.mubr.f32.gmra.mrb[0].mxu0 %v249
    %v251 = vpop.f32.mrb[0].mxu0
    %v252 = vadd.f32 %v153, %v251
    %v253 = vpop.f32.mrb[0].mxu0
    %254 = vdwg.mxu0
    %255 = vmatprep.subr.mxu0 0.0
    %v256 = vand.u32 %v15, 4294901760
    %v257 = vsub.f32 %v15, %v256
    %258 = vmatpush1.msra.mxu0 %v257
    %259 = vmatprep.subr.mxu0 0.0
    %v260 = vand.u32 %v16, 4294901760
    %v261 = vsub.f32 %v16, %v260
    %262 = vmatpush1.msra.mxu0 %v261
    %263 = vmatprep.subr.mxu0 0.0
    %264 = vmatpush1.msra.mxu0 0.0
    %265 = vmatprep.subr.mxu0 0.0
    %266 = vmatpush1.msra.mxu0 0.0
    %267 = vmatprep.subr.mxu0 0.0
    %268 = vmatpush1.msra.mxu0 0.0
    %269 = vmatprep.subr.mxu0 0.0
    %270 = vmatpush1.msra.mxu0 0.0
    %271 = vmatprep.subr.mxu0 0.0
    %272 = vmatpush1.msra.mxu0 0.0
    %273 = vmatprep.subr.mxu0 0.0
    %274 = vmatpush1.msra.mxu0 0.0
    %275 = vmatprep.subr.mxu0 0.0
    %276 = vmatpush1.msra.mxu0 0.0
    %277 = vmatprep.subr.mxu0 0.0
    %278 = vmatpush1.msra.mxu0 0.0
    %279 = vmatprep.subr.mxu0 0.0
    %280 = vmatpush1.msra.mxu0 0.0
    %281 = vmatprep.subr.mxu0 0.0
    %282 = vmatpush1.msra.mxu0 0.0
    %283 = vmatprep.subr.mxu0 0.0
    %284 = vmatpush1.msra.mxu0 0.0
    %285 = vmatprep.subr.mxu0 0.0
    %286 = vmatpush1.msra.mxu0 0.0
    %287 = vmatprep.subr.mxu0 0.0
    %288 = vmatpush1.msra.mxu0 0.0
    %289 = vmatprep.subr.mxu0 0.0
    %290 = vmatpush1.msra.mxu0 0.0
    %291 = vmatprep.subr.mxu0 0.0
    %292 = vmatpush1.msra.mxu0 0.0
    %293 = vmatprep.subr.mxu0 0.0
    %294 = vmatpush1.msra.mxu0 0.0
    %295 = vmatprep.subr.mxu0 0.0
    %296 = vmatpush1.msra.mxu0 0.0
    %297 = vmatprep.subr.mxu0 0.0
    %298 = vmatpush1.msra.mxu0 0.0
    %299 = vmatprep.subr.mxu0 0.0
    %300 = vmatpush1.msra.mxu0 0.0
    %301 = vmatprep.subr.mxu0 0.0
    %302 = vmatpush1.msra.mxu0 0.0
    %303 = vmatprep.subr.mxu0 0.0
    %304 = vmatpush1.msra.mxu0 0.0
    %305 = vmatprep.subr.mxu0 0.0
    %306 = vmatpush1.msra.mxu0 0.0
    %307 = vmatprep.subr.mxu0 0.0
    %308 = vmatpush1.msra.mxu0 0.0
    %309 = vmatprep.subr.mxu0 0.0
    %310 = vmatpush1.msra.mxu0 0.0
    %311 = vmatprep.subr.mxu0 0.0
    %312 = vmatpush1.msra.mxu0 0.0
    %313 = vmatprep.subr.mxu0 0.0
    %314 = vmatpush1.msra.mxu0 0.0
    %315 = vmatprep.subr.mxu0 0.0
    %316 = vmatpush1.msra.mxu0 0.0
    %317 = vmatprep.subr.mxu0 0.0
    %318 = vmatpush1.msra.mxu0 0.0
    %319 = vmatprep.subr.mxu0 0.0
    %320 = vmatpush1.msra.mxu0 0.0
    %321 = vmatprep.subr.mxu0 0.0
    %322 = vmatpush1.msra.mxu0 0.0
    %323 = vmatprep.mubr.f32.mxu0 0.0
    %v324 = vand.u32 %v38, 4294901760
    %v325 = vsub.f32 %v38, %v324
    %326 = vmatmul.mubr.f32.gmra.mrb[0].mxu0 %v325
    %v327 = vpop.f32.mrb[0].mxu0
    %v328 = vadd.f32 %v234, %v327
    %v329 = vpop.f32.mrb[0].mxu0
    %330 = vmatprep.mubr.f32.mxu0 0.0
    %v331 = vand.u32 %v41, 4294901760
    %v332 = vsub.f32 %v41, %v331
    %333 = vmatmul.mubr.f32.gmra.mrb[0].mxu0 %v332
    %v334 = vpop.f32.mrb[0].mxu0
    %v335 = vadd.f32 %v240, %v334
    %v336 = vpop.f32.mrb[0].mxu0
    %337 = vmatprep.mubr.f32.mxu0 0.0
    %v338 = vand.u32 %v44, 4294901760
    %v339 = vsub.f32 %v44, %v338
    %340 = vmatmul.mubr.f32.gmra.mrb[0].mxu0 %v339
    %v341 = vpop.f32.mrb[0].mxu0
    %v342 = vadd.f32 %v246, %v341
    %v343 = vpop.f32.mrb[0].mxu0
    %344 = vmatprep.mubr.f32.mxu0 0.0
    %v345 = vand.u32 %v47, 4294901760
    %v346 = vsub.f32 %v47, %v345
    %347 = vmatmul.mubr.f32.gmra.mrb[0].mxu0 %v346
    %v348 = vpop.f32.mrb[0].mxu0
    %v349 = vadd.f32 %v252, %v348
    %v350 = vpop.f32.mrb[0].mxu0
    %351 = vdwg.mxu0
    %352 = vmatprep.subr.mxu0 0.0
    %v353 = vand.u32 %v15, 4294901760
    %354 = vmatpush1.msra.mxu0 %v353
    %355 = vmatprep.subr.mxu0 0.0
    %v356 = vand.u32 %v16, 4294901760
    %357 = vmatpush1.msra.mxu0 %v356
    %358 = vmatprep.subr.mxu0 0.0
    %359 = vmatpush1.msra.mxu0 0.0
    %360 = vmatprep.subr.mxu0 0.0
    %361 = vmatpush1.msra.mxu0 0.0
    %362 = vmatprep.subr.mxu0 0.0
    %363 = vmatpush1.msra.mxu0 0.0
    %364 = vmatprep.subr.mxu0 0.0
    %365 = vmatpush1.msra.mxu0 0.0
    %366 = vmatprep.subr.mxu0 0.0
    %367 = vmatpush1.msra.mxu0 0.0
    %368 = vmatprep.subr.mxu0 0.0
    %369 = vmatpush1.msra.mxu0 0.0
    %370 = vmatprep.subr.mxu0 0.0
    %371 = vmatpush1.msra.mxu0 0.0
    %372 = vmatprep.subr.mxu0 0.0
    %373 = vmatpush1.msra.mxu0 0.0
    %374 = vmatprep.subr.mxu0 0.0
    %375 = vmatpush1.msra.mxu0 0.0
    %376 = vmatprep.subr.mxu0 0.0
    %377 = vmatpush1.msra.mxu0 0.0
    %378 = vmatprep.subr.mxu0 0.0
    %379 = vmatpush1.msra.mxu0 0.0
    %380 = vmatprep.subr.mxu0 0.0
    %381 = vmatpush1.msra.mxu0 0.0
    %382 = vmatprep.subr.mxu0 0.0
    %383 = vmatpush1.msra.mxu0 0.0
    %384 = vmatprep.subr.mxu0 0.0
    %385 = vmatpush1.msra.mxu0 0.0
    %386 = vmatprep.subr.mxu0 0.0
    %387 = vmatpush1.msra.mxu0 0.0
    %388 = vmatprep.subr.mxu0 0.0
    %389 = vmatpush1.msra.mxu0 0.0
    %390 = vmatprep.subr.mxu0 0.0
    %391 = vmatpush1.msra.mxu0 0.0
    %392 = vmatprep.subr.mxu0 0.0
    %393 = vmatpush1.msra.mxu0 0.0
    %394 = vmatprep.subr.mxu0 0.0
    %395 = vmatpush1.msra.mxu0 0.0
    %396 = vmatprep.subr.mxu0 0.0
    %397 = vmatpush1.msra.mxu0 0.0
    %398 = vmatprep.subr.mxu0 0.0
    %399 = vmatpush1.msra.mxu0 0.0
    %400 = vmatprep.subr.mxu0 0.0
    %401 = vmatpush1.msra.mxu0 0.0
    %402 = vmatprep.subr.mxu0 0.0
    %403 = vmatpush1.msra.mxu0 0.0
    %404 = vmatprep.subr.mxu0 0.0
    %405 = vmatpush1.msra.mxu0 0.0
    %406 = vmatprep.subr.mxu0 0.0
    %407 = vmatpush1.msra.mxu0 0.0
    %408 = vmatprep.subr.mxu0 0.0
    %409 = vmatpush1.msra.mxu0 0.0
    %410 = vmatprep.subr.mxu0 0.0
    %411 = vmatpush1.msra.mxu0 0.0
    %412 = vmatprep.subr.mxu0 0.0
    %413 = vmatpush1.msra.mxu0 0.0
    %414 = vmatprep.subr.mxu0 0.0
    %415 = vmatpush1.msra.mxu0 0.0
    %416 = vmatprep.subr.mxu0 0.0
    %417 = vmatpush1.msra.mxu0 0.0
    %418 = vmatprep.mubr.f32.mxu0 0.0
    %v419 = vand.u32 %v38, 4294901760
    %v420 = vsub.f32 %v38, %v419
    %v421 = vand.u32 %v420, 4294901760
    %422 = vmatmul.mubr.f32.gmra.mrb[0].mxu0 %v421
    %v423 = vpop.f32.mrb[0].mxu0
    %v424 = vadd.f32 %v328, %v423
    %v425 = vpop.f32.mrb[0].mxu0
    %426 = vmatprep.mubr.f32.mxu0 0.0
    %v427 = vand.u32 %v41, 4294901760
    %v428 = vsub.f32 %v41, %v427
    %v429 = vand.u32 %v428, 4294901760
    %430 = vmatmul.mubr.f32.gmra.mrb[0].mxu0 %v429
    %v431 = vpop.f32.mrb[0].mxu0
    %v432 = vadd.f32 %v335, %v431
    %v433 = vpop.f32.mrb[0].mxu0
    %434 = vmatprep.mubr.f32.mxu0 0.0
    %v435 = vand.u32 %v44, 4294901760
    %v436 = vsub.f32 %v44, %v435
    %v437 = vand.u32 %v436, 4294901760
    %438 = vmatmul.mubr.f32.gmra.mrb[0].mxu0 %v437
    %v439 = vpop.f32.mrb[0].mxu0
    %v440 = vadd.f32 %v342, %v439
    %v441 = vpop.f32.mrb[0].mxu0
    %442 = vmatprep.mubr.f32.mxu0 0.0
    %v443 = vand.u32 %v47, 4294901760
    %v444 = vsub.f32 %v47, %v443
    %v445 = vand.u32 %v444, 4294901760
    %446 = vmatmul.mubr.f32.gmra.mrb[0].mxu0 %v445
    %v447 = vpop.f32.mrb[0].mxu0
    %v448 = vadd.f32 %v349, %v447
    %v449 = vpop.f32.mrb[0].mxu0
    %450 = vdwg.mxu0
    %451 = vmatprep.subr.mxu0 0.0
    %v452 = vand.u32 %v15, 4294901760
    %v453 = vsub.f32 %v15, %v452
    %v454 = vand.u32 %v453, 4294901760
    %455 = vmatpush1.msra.mxu0 %v454
    %456 = vmatprep.subr.mxu0 0.0
    %v457 = vand.u32 %v16, 4294901760
    %v458 = vsub.f32 %v16, %v457
    %v459 = vand.u32 %v458, 4294901760
    %460 = vmatpush1.msra.mxu0 %v459
    %461 = vmatprep.subr.mxu0 0.0
    %462 = vmatpush1.msra.mxu0 0.0
    %463 = vmatprep.subr.mxu0 0.0
    %464 = vmatpush1.msra.mxu0 0.0
    %465 = vmatprep.subr.mxu0 0.0
    %466 = vmatpush1.msra.mxu0 0.0
    %467 = vmatprep.subr.mxu0 0.0
    %468 = vmatpush1.msra.mxu0 0.0
    %469 = vmatprep.subr.mxu0 0.0
    %470 = vmatpush1.msra.mxu0 0.0
    %471 = vmatprep.subr.mxu0 0.0
    %472 = vmatpush1.msra.mxu0 0.0
    %473 = vmatprep.subr.mxu0 0.0
    %474 = vmatpush1.msra.mxu0 0.0
    %475 = vmatprep.subr.mxu0 0.0
    %476 = vmatpush1.msra.mxu0 0.0
    %477 = vmatprep.subr.mxu0 0.0
    %478 = vmatpush1.msra.mxu0 0.0
    %479 = vmatprep.subr.mxu0 0.0
    %480 = vmatpush1.msra.mxu0 0.0
    %481 = vmatprep.subr.mxu0 0.0
    %482 = vmatpush1.msra.mxu0 0.0
    %483 = vmatprep.subr.mxu0 0.0
    %484 = vmatpush1.msra.mxu0 0.0
    %485 = vmatprep.subr.mxu0 0.0
    %486 = vmatpush1.msra.mxu0 0.0
    %487 = vmatprep.subr.mxu0 0.0
    %488 = vmatpush1.msra.mxu0 0.0
    %489 = vmatprep.subr.mxu0 0.0
    %490 = vmatpush1.msra.mxu0 0.0
    %491 = vmatprep.subr.mxu0 0.0
    %492 = vmatpush1.msra.mxu0 0.0
    %493 = vmatprep.subr.mxu0 0.0
    %494 = vmatpush1.msra.mxu0 0.0
    %495 = vmatprep.subr.mxu0 0.0
    %496 = vmatpush1.msra.mxu0 0.0
    %497 = vmatprep.subr.mxu0 0.0
    %498 = vmatpush1.msra.mxu0 0.0
    %499 = vmatprep.subr.mxu0 0.0
    %500 = vmatpush1.msra.mxu0 0.0
    %501 = vmatprep.subr.mxu0 0.0
    %502 = vmatpush1.msra.mxu0 0.0
    %503 = vmatprep.subr.mxu0 0.0
    %504 = vmatpush1.msra.mxu0 0.0
    %505 = vmatprep.subr.mxu0 0.0
    %506 = vmatpush1.msra.mxu0 0.0
    %507 = vmatprep.subr.mxu0 0.0
    %508 = vmatpush1.msra.mxu0 0.0
    %509 = vmatprep.subr.mxu0 0.0
    %510 = vmatpush1.msra.mxu0 0.0
    %511 = vmatprep.subr.mxu0 0.0
    %512 = vmatpush1.msra.mxu0 0.0
    %513 = vmatprep.subr.mxu0 0.0
    %514 = vmatpush1.msra.mxu0 0.0
    %515 = vmatprep.subr.mxu0 0.0
    %516 = vmatpush1.msra.mxu0 0.0
    %517 = vmatprep.subr.mxu0 0.0
    %518 = vmatpush1.msra.mxu0 0.0
    %519 = vmatprep.subr.mxu0 0.0
    %520 = vmatpush1.msra.mxu0 0.0
    %521 = vmatprep.mubr.f32.mxu0 0.0
    %v522 = vand.u32 %v38, 4294901760
    %523 = vmatmul.mubr.f32.gmra.mrb[0].mxu0 %v522
    %v524 = vpop.f32.mrb[0].mxu0
    %v525 = vadd.f32 %v424, %v524
    %v526 = vpop.f32.mrb[0].mxu0
    %527 = vmatprep.mubr.f32.mxu0 0.0
    %v528 = vand.u32 %v41, 4294901760
    %529 = vmatmul.mubr.f32.gmra.mrb[0].mxu0 %v528
    %v530 = vpop.f32.mrb[0].mxu0
    %v531 = vadd.f32 %v432, %v530
    %v532 = vpop.f32.mrb[0].mxu0
    %533 = vmatprep.mubr.f32.mxu0 0.0
    %v534 = vand.u32 %v44, 4294901760
    %535 = vmatmul.mubr.f32.gmra.mrb[0].mxu0 %v534
    %v536 = vpop.f32.mrb[0].mxu0
    %v537 = vadd.f32 %v440, %v536
    %v538 = vpop.f32.mrb[0].mxu0
    %539 = vmatprep.mubr.f32.mxu0 0.0
    %v540 = vand.u32 %v47, 4294901760
    %541 = vmatmul.mubr.f32.gmra.mrb[0].mxu0 %v540
    %v542 = vpop.f32.mrb[0].mxu0
    %v543 = vadd.f32 %v448, %v542
    %v544 = vpop.f32.mrb[0].mxu0
    %545 = vdwg.mxu0
    %546 = vmatprep.subr.mxu0 0.0
    %v547 = vand.u32 %v15, 4294901760
    %548 = vmatpush1.msra.mxu0 %v547
    %549 = vmatprep.subr.mxu0 0.0
    %v550 = vand.u32 %v16, 4294901760
    %551 = vmatpush1.msra.mxu0 %v550
    %552 = vmatprep.subr.mxu0 0.0
    %553 = vmatpush1.msra.mxu0 0.0
    %554 = vmatprep.subr.mxu0 0.0
    %555 = vmatpush1.msra.mxu0 0.0
    %556 = vmatprep.subr.mxu0 0.0
    %557 = vmatpush1.msra.mxu0 0.0
    %558 = vmatprep.subr.mxu0 0.0
    %559 = vmatpush1.msra.mxu0 0.0
    %560 = vmatprep.subr.mxu0 0.0
    %561 = vmatpush1.msra.mxu0 0.0
    %562 = vmatprep.subr.mxu0 0.0
    %563 = vmatpush1.msra.mxu0 0.0
    %564 = vmatprep.subr.mxu0 0.0
    %565 = vmatpush1.msra.mxu0 0.0
    %566 = vmatprep.subr.mxu0 0.0
    %567 = vmatpush1.msra.mxu0 0.0
    %568 = vmatprep.subr.mxu0 0.0
    %569 = vmatpush1.msra.mxu0 0.0
    %570 = vmatprep.subr.mxu0 0.0
    %571 = vmatpush1.msra.mxu0 0.0
    %572 = vmatprep.subr.mxu0 0.0
    %573 = vmatpush1.msra.mxu0 0.0
    %574 = vmatprep.subr.mxu0 0.0
    %575 = vmatpush1.msra.mxu0 0.0
    %576 = vmatprep.subr.mxu0 0.0
    %577 = vmatpush1.msra.mxu0 0.0
    %578 = vmatprep.subr.mxu0 0.0
    %579 = vmatpush1.msra.mxu0 0.0
    %580 = vmatprep.subr.mxu0 0.0
    %581 = vmatpush1.msra.mxu0 0.0
    %582 = vmatprep.subr.mxu0 0.0
    %583 = vmatpush1.msra.mxu0 0.0
    %584 = vmatprep.subr.mxu0 0.0
    %585 = vmatpush1.msra.mxu0 0.0
    %586 = vmatprep.subr.mxu0 0.0
    %587 = vmatpush1.msra.mxu0 0.0
    %588 = vmatprep.subr.mxu0 0.0
    %589 = vmatpush1.msra.mxu0 0.0
    %590 = vmatprep.subr.mxu0 0.0
    %591 = vmatpush1.msra.mxu0 0.0
    %592 = vmatprep.subr.mxu0 0.0
    %593 = vmatpush1.msra.mxu0 0.0
    %594 = vmatprep.subr.mxu0 0.0
    %595 = vmatpush1.msra.mxu0 0.0
    %596 = vmatprep.subr.mxu0 0.0
    %597 = vmatpush1.msra.mxu0 0.0
    %598 = vmatprep.subr.mxu0 0.0
    %599 = vmatpush1.msra.mxu0 0.0
    %600 = vmatprep.subr.mxu0 0.0
    %601 = vmatpush1.msra.mxu0 0.0
    %602 = vmatprep.subr.mxu0 0.0
    %603 = vmatpush1.msra.mxu0 0.0
    %604 = vmatprep.subr.mxu0 0.0
    %605 = vmatpush1.msra.mxu0 0.0
    %606 = vmatprep.subr.mxu0 0.0
    %607 = vmatpush1.msra.mxu0 0.0
    %608 = vmatprep.subr.mxu0 0.0
    %609 = vmatpush1.msra.mxu0 0.0
    %610 = vmatprep.subr.mxu0 0.0
    %611 = vmatpush1.msra.mxu0 0.0
    %612 = vmatprep.mubr.f32.mxu0 0.0
    %v613 = vand.u32 %v38, 4294901760
    %614 = vmatmul.mubr.f32.gmra.mrb[0].mxu0 %v613
    %v615 = vpop.f32.mrb[0].mxu0
    %v616 = vadd.f32 %v525, %v615
    %v617 = vpop.f32.mrb[0].mxu0
    %618 = vmatprep.mubr.f32.mxu0 0.0
    %v619 = vand.u32 %v41, 4294901760
    %620 = vmatmul.mubr.f32.gmra.mrb[0].mxu0 %v619
    %v621 = vpop.f32.mrb[0].mxu0
    %v622 = vadd.f32 %v531, %v621
    %v623 = vpop.f32.mrb[0].mxu0
    %624 = vmatprep.mubr.f32.mxu0 0.0
    %v625 = vand.u32 %v44, 4294901760
    %626 = vmatmul.mubr.f32.gmra.mrb[0].mxu0 %v625
    %v627 = vpop.f32.mrb[0].mxu0
    %v628 = vadd.f32 %v537, %v627
    %v629 = vpop.f32.mrb[0].mxu0
    %630 = vmatprep.mubr.f32.mxu0 0.0
    %v631 = vand.u32 %v47, 4294901760
    %632 = vmatmul.mubr.f32.gmra.mrb[0].mxu0 %v631
    %v633 = vpop.f32.mrb[0].mxu0
    %v634 = vadd.f32 %v543, %v633
    %v635 = vpop.f32.mrb[0].mxu0
    %636 = vdwg.mxu0
    %v637 = vand.u32 2147483647, %v616
    %vm638 = vcmp.le.f32.partialorder %v637, 0.7853982
    %vm639 = vcmp.lt.s32.totalorder %v616, 0
    %v640 = vand.u32 %v616, 2139095040
    %v641 = vshrl.u32 %v640, 23
    %v642 = vsub.s32 %v641, 127
    %v643 = vand.u32 2147483647, %v616
    %v644 = vand.u32 %v643, 8388607
    %v645 = vor.u32 %v644, 8388608
    %v646 = vsub.s32 0, %v645
    %v647 = vadd.s32 %v642, 1
    %vm648 = vcmp.gt.s32.totalorder %v647, 0
    %v649 = vsel %vm648, %v647, 0
    %v650 = vshrl.u32 %v649, 5
    %v651 = vand.u32 %v649, 31
    %v652 = vsub.s32 32, %v651
    %v653 = vshrl.u32 683565275, %v652
    %v654 = vshll.u32 683565275, %v651
    %v655 = vshrl.u32 2475754826, %v652
    %v656 = vor.u32 %v654, %v655
    %v657 = vshll.u32 2475754826, %v651
    %v658 = vshrl.u32 2131351028, %v652
    %v659 = vor.u32 %v657, %v658
    %v660 = vshll.u32 2131351028, %v651
    %v661 = vshrl.u32 2102212464, %v652
    %v662 = vor.u32 %v660, %v661
    %v663 = vshll.u32 2102212464, %v651
    %v664 = vshrl.u32 920167782, %v652
    %v665 = vor.u32 %v663, %v664
    %v666 = vshll.u32 920167782, %v651
    %v667 = vshrl.u32 1326507024, %v652
    %v668 = vor.u32 %v666, %v667
    %vm669 = vcmp.lt.s32.totalorder %v650, 1
    %vm670 = vcmp.lt.s32.totalorder %v650, 2
    %vm671 = vcmp.lt.s32.totalorder %v650, 3
    %vm672 = vcmp.lt.s32.totalorder %v650, 4
    %v673 = vsel %vm669, %v653, %v656
    %v674 = vsel %vm672, %v662, 2102212464
    %v675 = vsel %vm671, %v659, %v674
    %v676 = vsel %vm670, %v673, %v675
    %v677 = vsel %vm669, %v656, %v659
    %v678 = vsel %vm672, %v665, 920167782
    %v679 = vsel %vm671, %v662, %v678
    %v680 = vsel %vm670, %v677, %v679
    %v681 = vsel %vm669, %v659, %v662
    %v682 = vsel %vm672, %v668, 1326507024
    %v683 = vsel %vm671, %v665, %v682
    %v684 = vsel %vm670, %v681, %v683
    %v685 = vshll.u32 %v645, 8
    %v686 = vmul.u32.u64.compose %v685, %v684
    %v687 = vextract.low.u32 %v686
    %v688 = vextract.high.u32 %v686
    %v689 = vmul.u32.u64.compose %v685, %v680
    %v690 = vextract.low.u32 %v689
    %v691 = vextract.high.u32 %v689
    %v692 = vmul.u32 %v685, %v676
    %v693 = vadd.s32 %v688, %v690
    %vm694 = vc.u32 %v688, %v690
    %v695 = vadd.s32 %v691, 1
    %v696 = vsel %vm694, %v695, %v691
    %v697 = vadd.s32 %v692, %v696
    %v698 = vadd.s32 %v697, 536870912
    %v699 = vshrl.u32 %v698, 30
    %v700 = vshll.u32 %v699, 30
    %v701 = vsub.s32 %v697, %v700
    %vm702 = vcmp.lt.s32.totalorder %v701, 0
    %v703 = vsub.s32 0, %v701
    %v704 = vsel %vm702, %v703, %v701
    %v705 = vclz %v704
    %v706 = vsub.s32 %v705, 2
    %vm707 = vcmp.gt.s32.totalorder 0, %v706
    %v708 = vsel %vm707, 0, %v706
    %v709 = vsub.s32 32, %v708
    %v710 = vshll.u32 %v701, %v708
    %v711 = vshrl.u32 %v693, %v709
    %v712 = vor.u32 %v710, %v711
    %v713 = vsub.s32 4294967266, %v708
    %v714 = vadd.s32 %v713, 127
    %v715 = vshll.u32 %v714, 23
    %v716 = vor.u32 4788187, %v715
    %v717 = vand.u32 2147483647, %v716
    %v719 = vcvt.s32.f32 %v712
    %v720 = vmul.f32 %v719, %v717
    %v721 = vxor.u32 %v720, 2147483648
    %v722 = vsel %vm639, %v721, %v720
    %v723 = vsub.s32 4, %v699
    %v724 = vsel %vm639, %v723, %v699
    %v725 = vsel %vm638, %v616, %v722
    %v726 = vsel %vm638, 0, %v724
    %v727 = vcosq.f32.pop %v725
    %v728 = vsinq.f32.pop %v725
    %vm729 = vweird.f32 %v616
    %v730 = vand.u32 %v726, 3
    %vm731 = vcmp.lt.s32.totalorder %v730, 2
    %vm732 = vcmp.eq.s32.totalorder %v730, 0
    %v733 = vxor.u32 %v728, 2147483648
    %v734 = vsel %vm732, %v727, %v733
    %vm735 = vcmp.eq.s32.totalorder %v730, 2
    %v736 = vxor.u32 %v727, 2147483648
    %v737 = vsel %vm735, %v736, %v728
    %v738 = vsel %vm731, %v734, %v737
    %v739 = vsel %vm729, nan, %v738
    %v740 = vand.u32 2147483647, %v622
    %vm741 = vcmp.le.f32.partialorder %v740, 0.7853982
    %vm742 = vcmp.lt.s32.totalorder %v622, 0
    %v743 = vand.u32 %v622, 2139095040
    %v744 = vshrl.u32 %v743, 23
    %v745 = vsub.s32 %v744, 127
    %v746 = vand.u32 2147483647, %v622
    %v747 = vand.u32 %v746, 8388607
    %v748 = vor.u32 %v747, 8388608
    %v749 = vsub.s32 0, %v748
    %v750 = vadd.s32 %v745, 1
    %vm751 = vcmp.gt.s32.totalorder %v750, 0
    %v752 = vsel %vm751, %v750, 0
    %v753 = vshrl.u32 %v752, 5
    %v754 = vand.u32 %v752, 31
    %v755 = vsub.s32 32, %v754
    %v756 = vshrl.u32 683565275, %v755
    %v757 = vshll.u32 683565275, %v754
    %v758 = vshrl.u32 2475754826, %v755
    %v759 = vor.u32 %v757, %v758
    %v760 = vshll.u32 2475754826, %v754
    %v761 = vshrl.u32 2131351028, %v755
    %v762 = vor.u32 %v760, %v761
    %v763 = vshll.u32 2131351028, %v754
    %v764 = vshrl.u32 2102212464, %v755
    %v765 = vor.u32 %v763, %v764
    %v766 = vshll.u32 2102212464, %v754
    %v767 = vshrl.u32 920167782, %v755
    %v768 = vor.u32 %v766, %v767
    %v769 = vshll.u32 920167782, %v754
    %v770 = vshrl.u32 1326507024, %v755
    %v771 = vor.u32 %v769, %v770
    %vm772 = vcmp.lt.s32.totalorder %v753, 1
    %vm773 = vcmp.lt.s32.totalorder %v753, 2
    %vm774 = vcmp.lt.s32.totalorder %v753, 3
    %vm775 = vcmp.lt.s32.totalorder %v753, 4
    %v776 = vsel %vm772, %v756, %v759
    %v777 = vsel %vm775, %v765, 2102212464
    %v778 = vsel %vm774, %v762, %v777
    %v779 = vsel %vm773, %v776, %v778
    %v780 = vsel %vm772, %v759, %v762
    %v781 = vsel %vm775, %v768, 920167782
    %v782 = vsel %vm774, %v765, %v781
    %v783 = vsel %vm773, %v780, %v782
    %v784 = vsel %vm772, %v762, %v765
    %v785 = vsel %vm775, %v771, 1326507024
    %v786 = vsel %vm774, %v768, %v785
    %v787 = vsel %vm773, %v784, %v786
    %v788 = vshll.u32 %v748, 8
    %v789 = vmul.u32.u64.compose %v788, %v787
    %v790 = vextract.low.u32 %v789
    %v791 = vextract.high.u32 %v789
    %v792 = vmul.u32.u64.compose %v788, %v783
    %v793 = vextract.low.u32 %v792
    %v794 = vextract.high.u32 %v792
    %v795 = vmul.u32 %v788, %v779
    %v796 = vadd.s32 %v791, %v793
    %vm797 = vc.u32 %v791, %v793
    %v798 = vadd.s32 %v794, 1
    %v799 = vsel %vm797, %v798, %v794
    %v800 = vadd.s32 %v795, %v799
    %v801 = vadd.s32 %v800, 536870912
    %v802 = vshrl.u32 %v801, 30
    %v803 = vshll.u32 %v802, 30
    %v804 = vsub.s32 %v800, %v803
    %vm805 = vcmp.lt.s32.totalorder %v804, 0
    %v806 = vsub.s32 0, %v804
    %v807 = vsel %vm805, %v806, %v804
    %v808 = vclz %v807
    %v809 = vsub.s32 %v808, 2
    %vm810 = vcmp.gt.s32.totalorder 0, %v809
    %v811 = vsel %vm810, 0, %v809
    %v812 = vsub.s32 32, %v811
    %v813 = vshll.u32 %v804, %v811
    %v814 = vshrl.u32 %v796, %v812
    %v815 = vor.u32 %v813, %v814
    %v816 = vsub.s32 4294967266, %v811
    %v817 = vadd.s32 %v816, 127
    %v818 = vshll.u32 %v817, 23
    %v819 = vor.u32 4788187, %v818
    %v820 = vand.u32 2147483647, %v819
    %v822 = vcvt.s32.f32 %v815
    %v823 = vmul.f32 %v822, %v820
    %v824 = vxor.u32 %v823, 2147483648
    %v825 = vsel %vm742, %v824, %v823
    %v826 = vsub.s32 4, %v802
    %v827 = vsel %vm742, %v826, %v802
    %v828 = vsel %vm741, %v622, %v825
    %v829 = vsel %vm741, 0, %v827
    %v830 = vcosq.f32.pop %v828
    %v831 = vsinq.f32.pop %v828
    %vm832 = vweird.f32 %v622
    %v833 = vand.u32 %v829, 3
    %vm834 = vcmp.lt.s32.totalorder %v833, 2
    %vm835 = vcmp.eq.s32.totalorder %v833, 0
    %v836 = vxor.u32 %v831, 2147483648
    %v837 = vsel %vm835, %v830, %v836
    %vm838 = vcmp.eq.s32.totalorder %v833, 2
    %v839 = vxor.u32 %v830, 2147483648
    %v840 = vsel %vm838, %v839, %v831
    %v841 = vsel %vm834, %v837, %v840
    %v842 = vsel %vm832, nan, %v841
    %v843 = vand.u32 2147483647, %v628
    %vm844 = vcmp.le.f32.partialorder %v843, 0.7853982
    %vm845 = vcmp.lt.s32.totalorder %v628, 0
    %v846 = vand.u32 %v628, 2139095040
    %v847 = vshrl.u32 %v846, 23
    %v848 = vsub.s32 %v847, 127
    %v849 = vand.u32 2147483647, %v628
    %v850 = vand.u32 %v849, 8388607
    %v851 = vor.u32 %v850, 8388608
    %v852 = vsub.s32 0, %v851
    %v853 = vadd.s32 %v848, 1
    %vm854 = vcmp.gt.s32.totalorder %v853, 0
    %v855 = vsel %vm854, %v853, 0
    %v856 = vshrl.u32 %v855, 5
    %v857 = vand.u32 %v855, 31
    %v858 = vsub.s32 32, %v857
    %v859 = vshrl.u32 683565275, %v858
    %v860 = vshll.u32 683565275, %v857
    %v861 = vshrl.u32 2475754826, %v858
    %v862 = vor.u32 %v860, %v861
    %v863 = vshll.u32 2475754826, %v857
    %v864 = vshrl.u32 2131351028, %v858
    %v865 = vor.u32 %v863, %v864
    %v866 = vshll.u32 2131351028, %v857
    %v867 = vshrl.u32 2102212464, %v858
    %v868 = vor.u32 %v866, %v867
    %v869 = vshll.u32 2102212464, %v857
    %v870 = vshrl.u32 920167782, %v858
    %v871 = vor.u32 %v869, %v870
    %v872 = vshll.u32 920167782, %v857
    %v873 = vshrl.u32 1326507024, %v858
    %v874 = vor.u32 %v872, %v873
    %vm875 = vcmp.lt.s32.totalorder %v856, 1
    %vm876 = vcmp.lt.s32.totalorder %v856, 2
    %vm877 = vcmp.lt.s32.totalorder %v856, 3
    %vm878 = vcmp.lt.s32.totalorder %v856, 4
    %v879 = vsel %vm875, %v859, %v862
    %v880 = vsel %vm878, %v868, 2102212464
    %v881 = vsel %vm877, %v865, %v880
    %v882 = vsel %vm876, %v879, %v881
    %v883 = vsel %vm875, %v862, %v865
    %v884 = vsel %vm878, %v871, 920167782
    %v885 = vsel %vm877, %v868, %v884
    %v886 = vsel %vm876, %v883, %v885
    %v887 = vsel %vm875, %v865, %v868
    %v888 = vsel %vm878, %v874, 1326507024
    %v889 = vsel %vm877, %v871, %v888
    %v890 = vsel %vm876, %v887, %v889
    %v891 = vshll.u32 %v851, 8
    %v892 = vmul.u32.u64.compose %v891, %v890
    %v893 = vextract.low.u32 %v892
    %v894 = vextract.high.u32 %v892
    %v895 = vmul.u32.u64.compose %v891, %v886
    %v896 = vextract.low.u32 %v895
    %v897 = vextract.high.u32 %v895
    %v898 = vmul.u32 %v891, %v882
    %v899 = vadd.s32 %v894, %v896
    %vm900 = vc.u32 %v894, %v896
    %v901 = vadd.s32 %v897, 1
    %v902 = vsel %vm900, %v901, %v897
    %v903 = vadd.s32 %v898, %v902
    %v904 = vadd.s32 %v903, 536870912
    %v905 = vshrl.u32 %v904, 30
    %v906 = vshll.u32 %v905, 30
    %v907 = vsub.s32 %v903, %v906
    %vm908 = vcmp.lt.s32.totalorder %v907, 0
    %v909 = vsub.s32 0, %v907
    %v910 = vsel %vm908, %v909, %v907
    %v911 = vclz %v910
    %v912 = vsub.s32 %v911, 2
    %vm913 = vcmp.gt.s32.totalorder 0, %v912
    %v914 = vsel %vm913, 0, %v912
    %v915 = vsub.s32 32, %v914
    %v916 = vshll.u32 %v907, %v914
    %v917 = vshrl.u32 %v899, %v915
    %v918 = vor.u32 %v916, %v917
    %v919 = vsub.s32 4294967266, %v914
    %v920 = vadd.s32 %v919, 127
    %v921 = vshll.u32 %v920, 23
    %v922 = vor.u32 4788187, %v921
    %v923 = vand.u32 2147483647, %v922
    %v925 = vcvt.s32.f32 %v918
    %v926 = vmul.f32 %v925, %v923
    %v927 = vxor.u32 %v926, 2147483648
    %v928 = vsel %vm845, %v927, %v926
    %v929 = vsub.s32 4, %v905
    %v930 = vsel %vm845, %v929, %v905
    %v931 = vsel %vm844, %v628, %v928
    %v932 = vsel %vm844, 0, %v930
    %v933 = vcosq.f32.pop %v931
    %v934 = vsinq.f32.pop %v931
    %vm935 = vweird.f32 %v628
    %v936 = vand.u32 %v932, 3
    %vm937 = vcmp.lt.s32.totalorder %v936, 2
    %vm938 = vcmp.eq.s32.totalorder %v936, 0
    %v939 = vxor.u32 %v934, 2147483648
    %v940 = vsel %vm938, %v933, %v939
    %vm941 = vcmp.eq.s32.totalorder %v936, 2
    %v942 = vxor.u32 %v933, 2147483648
    %v943 = vsel %vm941, %v942, %v934
    %v944 = vsel %vm937, %v940, %v943
    %v945 = vsel %vm935, nan, %v944
    %v946 = vand.u32 2147483647, %v634
    %vm947 = vcmp.le.f32.partialorder %v946, 0.7853982
    %vm948 = vcmp.lt.s32.totalorder %v634, 0
    %v949 = vand.u32 %v634, 2139095040
    %v950 = vshrl.u32 %v949, 23
    %v951 = vsub.s32 %v950, 127
    %v952 = vand.u32 2147483647, %v634
    %v953 = vand.u32 %v952, 8388607
    %v954 = vor.u32 %v953, 8388608
    %v955 = vsub.s32 0, %v954
    %v956 = vadd.s32 %v951, 1
    %vm957 = vcmp.gt.s32.totalorder %v956, 0
    %v958 = vsel %vm957, %v956, 0
    %v959 = vshrl.u32 %v958, 5
    %v960 = vand.u32 %v958, 31
    %v961 = vsub.s32 32, %v960
    %v962 = vshrl.u32 683565275, %v961
    %v963 = vshll.u32 683565275, %v960
    %v964 = vshrl.u32 2475754826, %v961
    %v965 = vor.u32 %v963, %v964
    %v966 = vshll.u32 2475754826, %v960
    %v967 = vshrl.u32 2131351028, %v961
    %v968 = vor.u32 %v966, %v967
    %v969 = vshll.u32 2131351028, %v960
    %v970 = vshrl.u32 2102212464, %v961
    %v971 = vor.u32 %v969, %v970
    %v972 = vshll.u32 2102212464, %v960
    %v973 = vshrl.u32 920167782, %v961
    %v974 = vor.u32 %v972, %v973
    %v975 = vshll.u32 920167782, %v960
    %v976 = vshrl.u32 1326507024, %v961
    %v977 = vor.u32 %v975, %v976
    %vm978 = vcmp.lt.s32.totalorder %v959, 1
    %vm979 = vcmp.lt.s32.totalorder %v959, 2
    %vm980 = vcmp.lt.s32.totalorder %v959, 3
    %vm981 = vcmp.lt.s32.totalorder %v959, 4
    %v982 = vsel %vm978, %v962, %v965
    %v983 = vsel %vm981, %v971, 2102212464
    %v984 = vsel %vm980, %v968, %v983
    %v985 = vsel %vm979, %v982, %v984
    %v986 = vsel %vm978, %v965, %v968
    %v987 = vsel %vm981, %v974, 920167782
    %v988 = vsel %vm980, %v971, %v987
    %v989 = vsel %vm979, %v986, %v988
    %v990 = vsel %vm978, %v968, %v971
    %v991 = vsel %vm981, %v977, 1326507024
    %v992 = vsel %vm980, %v974, %v991
    %v993 = vsel %vm979, %v990, %v992
    %v994 = vshll.u32 %v954, 8
    %v995 = vmul.u32.u64.compose %v994, %v993
    %v996 = vextract.low.u32 %v995
    %v997 = vextract.high.u32 %v995
    %v998 = vmul.u32.u64.compose %v994, %v989
    %v999 = vextract.low.u32 %v998
    %v1000 = vextract.high.u32 %v998
    %v1001 = vmul.u32 %v994, %v985
    %v1002 = vadd.s32 %v997, %v999
    %vm1003 = vc.u32 %v997, %v999
    %v1004 = vadd.s32 %v1000, 1
    %v1005 = vsel %vm1003, %v1004, %v1000
    %v1006 = vadd.s32 %v1001, %v1005
    %v1007 = vadd.s32 %v1006, 536870912
    %v1008 = vshrl.u32 %v1007, 30
    %v1009 = vshll.u32 %v1008, 30
    %v1010 = vsub.s32 %v1006, %v1009
    %vm1011 = vcmp.lt.s32.totalorder %v1010, 0
    %v1012 = vsub.s32 0, %v1010
    %v1013 = vsel %vm1011, %v1012, %v1010
    %v1014 = vclz %v1013
    %v1015 = vsub.s32 %v1014, 2
    %vm1016 = vcmp.gt.s32.totalorder 0, %v1015
    %v1017 = vsel %vm1016, 0, %v1015
    %v1018 = vsub.s32 32, %v1017
    %v1019 = vshll.u32 %v1010, %v1017
    %v1020 = vshrl.u32 %v1002, %v1018
    %v1021 = vor.u32 %v1019, %v1020
    %v1022 = vsub.s32 4294967266, %v1017
    %v1023 = vadd.s32 %v1022, 127
    %v1024 = vshll.u32 %v1023, 23
    %v1025 = vor.u32 4788187, %v1024
    %v1026 = vand.u32 2147483647, %v1025
    %v1028 = vcvt.s32.f32 %v1021
    %v1029 = vmul.f32 %v1028, %v1026
    %v1030 = vxor.u32 %v1029, 2147483648
    %v1031 = vsel %vm948, %v1030, %v1029
    %v1032 = vsub.s32 4, %v1008
    %v1033 = vsel %vm948, %v1032, %v1008
    %v1034 = vsel %vm947, %v634, %v1031
    %v1035 = vsel %vm947, 0, %v1033
    %v1036 = vcosq.f32.pop %v1034
    %v1037 = vsinq.f32.pop %v1034
    %vm1038 = vweird.f32 %v634
    %v1039 = vand.u32 %v1035, 3
    %vm1040 = vcmp.lt.s32.totalorder %v1039, 2
    %vm1041 = vcmp.eq.s32.totalorder %v1039, 0
    %v1042 = vxor.u32 %v1037, 2147483648
    %v1043 = vsel %vm1041, %v1036, %v1042
    %vm1044 = vcmp.eq.s32.totalorder %v1039, 2
    %v1045 = vxor.u32 %v1036, 2147483648
    %v1046 = vsel %vm1044, %v1045, %v1037
    %v1047 = vsel %vm1040, %v1043, %v1046
    %v1048 = vsel %vm1038, nan, %v1047
    %v1049 = vld [vmem:[%s1] sm:$0xff]
    %v1050 = vld [vmem:[%s1 + $0x8] sm:$0xff]
    %v1051 = vld [vmem:[%s1 + $0x10] sm:$0xff]
    %v1052 = vld [vmem:[%s1 + $0x18] sm:$0xff]
    %1053 = vrot.lane.b32.xlu0 %v739, 1
    %v1054 = vpop.permute.xlu0 %1053
    %1055 = vrot.lane.b32.xlu0 %v842, 1
    %v1056 = vpop.permute.xlu0 %1055
    %1057 = vrot.lane.b32.xlu0 %v945, 1
    %v1058 = vpop.permute.xlu0 %1057
    %1059 = vrot.lane.b32.xlu0 %v1048, 1
    %v1060 = vpop.permute.xlu0 %1059
    %v1061 = vsel %vm31, %v739, %v1054
    %v1062 = vsel %vm31, %v842, %v1056
    %v1063 = vsel %vm31, %v945, %v1058
    %v1064 = vsel %vm31, %v1048, %v1060
    %v1065 = vmul.f32 %v1049, %v739
    %v1066 = vmul.f32 %v1050, %v842
    %v1067 = vmul.f32 %v1051, %v945
    %v1068 = vmul.f32 %v1052, %v1048
    %1069 = vrot.lane.b32.xlu0 %v1065, 127
    %v1070 = vpop.permute.xlu0 %1069
    %1071 = vrot.lane.b32.xlu0 %v1066, 127
    %v1072 = vpop.permute.xlu0 %1071
    %1073 = vrot.lane.b32.xlu0 %v1067, 127
    %v1074 = vpop.permute.xlu0 %1073
    %1075 = vrot.lane.b32.xlu0 %v1068, 127
    %v1076 = vpop.permute.xlu0 %1075
    %v1077 = vsub.f32 0.0, %v1070
    %v1078 = vsub.f32 0.0, %v1072
    %v1079 = vsub.f32 0.0, %v1074
    %v1080 = vsub.f32 0.0, %v1076
    %1081 = vrot.lane.b32.xlu0 %v1049, 1
    %v1082 = vpop.permute.xlu0 %1081
    %1083 = vrot.lane.b32.xlu0 %v1050, 1
    %v1084 = vpop.permute.xlu0 %1083
    %1085 = vrot.lane.b32.xlu0 %v1051, 1
    %v1086 = vpop.permute.xlu0 %1085
    %1087 = vrot.lane.b32.xlu0 %v1052, 1
    %v1088 = vpop.permute.xlu0 %1087
    %v1089 = vmul.f32 %v1082, %v739
    %v1090 = vmul.f32 %v1084, %v842
    %v1091 = vmul.f32 %v1086, %v945
    %v1092 = vmul.f32 %v1088, %v1048
    %v1093 = vsel %vm31, %v1077, %v1089
    %v1094 = vsel %vm31, %v1078, %v1090
    %v1095 = vsel %vm31, %v1079, %v1091
    %v1096 = vsel %vm31, %v1080, %v1092
    %v1097 = vmul.f32 %v1049, %v1061
    %v1098 = vmul.f32 %v1050, %v1062
    %v1099 = vmul.f32 %v1051, %v1063
    %v1100 = vmul.f32 %v1052, %v1064
    %v1101 = vadd.f32 %v1097, %v1093
    %v1102 = vadd.f32 %v1098, %v1094
    %v1103 = vadd.f32 %v1099, %v1095
    %v1104 = vadd.f32 %v1100, %v1096
    %1105 = vst [vmem:[#allocation2] sm:$0xff] %v1101
    %1106 = vst [vmem:[#allocation2 + $0x8] sm:$0xff] %v1102
    %1107 = vst [vmem:[#allocation2 + $0x10] sm:$0xff] %v1103
    %1108 = vst [vmem:[#allocation2 + $0x18] sm:$0xff] %v1104
    // Predicated region
    $region14: #{tpu_custom_call.1} parent=1 // pred_check
      _
    $region15: #{tpu_custom_call.1} parent=1 // pred_check_branch
      %1110 = sbr.rel (0) target = $region17
    $region16: #{tpu_custom_call.1} parent=1 // pred_region
      %s1112 = ssub.s32 512, 512
      %1113 = vsyncadd [#allocation3], %s1112
      %s1114 = sshll.u32 [#allocation2], 4
      %s1115 = int_to_ptr.vmem [resolvable:$true] %s1114
      %1120 = dma.vmem_to_hbm [thread:$0]  %s1115, 512, %s3, [#allocation3], 128, 128, 8
    $region17: #{tpu_custom_call.1} parent=1 // pred_fallthru
      _
    // Predicated region
    $region18: #{tpu_custom_call.1} parent=1 // pred_check
      _
    $region19: #{tpu_custom_call.1} parent=1 // pred_check_branch
      %1122 = sbr.rel (0) target = $region21
    $region20: #{tpu_custom_call.1} parent=1 // pred_region
      %1123 = dma.done [#allocation3], 512
    $region21: #{tpu_custom_call.1} parent=1 // pred_fallthru
      _
    %1124 = vsyncpa [#allocation3], 1

</llo_original>
